<compile_context>
chip_gen: v5e
topology: v5e:2x2
jax: 0.10.0
libtpu: 0.0.40
codegen_flags: <defaults>
</compile_context>

<pallas_src>
import functools

import jax
import jax.numpy as jnp
from jax import lax
from jax.experimental import pallas as pl
from jax.experimental.pallas import tpu as pltpu

LANE = 128  # TPU lane width; output/bias/weight-rows are padded to a multiple.


def _classifier_eval_kernel(x_ref, w_ref, b_ref, o_ref):
    # x_ref: (TM, F) bf16 ; w_ref: (Npad, F) bf16 (nn.Linear layout, untransposed)
    # b_ref: (1, Npad) f32 ; o_ref: (TM, Npad) f32
    acc = lax.dot_general(
        x_ref[...], w_ref[...],
        dimension_numbers=(((1,), (1,)), ((), ())),   # contract over F on both
        preferred_element_type=jnp.float32,
    )
    o_ref[...] = (acc + b_ref[...]).astype(o_ref.dtype)


def _classifier_train_kernel(x_ref, m_ref, w_ref, b_ref, o_ref, *, scale):
    # Inverted dropout: mask-to-zero on the MXU input, rescale the (TM, Npad)
    # result (saves B*F VPU multiplies vs. scaling the activations).
    x = x_ref[...] * m_ref[...]                       # mask is exact 0/1 in bf16
    acc = lax.dot_general(
        x, w_ref[...],
        dimension_numbers=(((1,), (1,)), ((), ())),
        preferred_element_type=jnp.float32,
    )
    if scale != 1.0:
        acc = acc * scale
    o_ref[...] = (acc + b_ref[...]).astype(o_ref.dtype)


def classifier_forward(x, weight, bias, *, key=None, p=0.5, training=False,
                       block_m=512):
    """Pallas forward of Classifier: x.view(B, -1) -> Dropout(p) -> Linear.

    x: (B, C, H, W) or (B, F); weight: (N, F) as in nn.Linear; bias: (N,).
    Returns (B, N) float32.
    """
    B = x.shape[0]
    x2 = x.reshape(B, -1)
    F_ = x2.shape[1]
    N, Fw = weight.shape
    assert Fw == F_, (Fw, F_)

    # bf16 MXU inputs (halves HBM/VMEM traffic); no-op if caller pre-cast once.
    if x2.dtype != jnp.bfloat16:
        x2 = x2.astype(jnp.bfloat16)
    w = weight if weight.dtype == jnp.bfloat16 else weight.astype(jnp.bfloat16)
    b = bias.astype(jnp.float32)

    # Lane-dense output: pad N up to a multiple of 128 (zero rows of W, zero bias).
    n_pad = pl.cdiv(N, LANE) * LANE
    if n_pad != N:
        w = jnp.pad(w, ((0, n_pad - N), (0, 0)))
        b = jnp.pad(b, (0, n_pad - N))
    b2 = b.reshape(1, n_pad)

    # Batch tiling: single block for small B, otherwise block_m-row tiles.
    tm = B if B <= block_m else block_m
    b_pad = pl.cdiv(B, tm) * tm
    if b_pad != B:
        x2 = jnp.pad(x2, ((0, b_pad - B), (0, 0)))
    grid = (b_pad // tm,)

    x_spec = pl.BlockSpec((tm, F_), lambda i: (i, 0))
    m_spec = pl.BlockSpec((tm, F_), lambda i: (i, 0))
    w_spec = pl.BlockSpec((n_pad, F_), lambda i: (0, 0))   # weight stays resident
    b_spec = pl.BlockSpec((1, n_pad), lambda i: (0, 0))    # bias stays resident
    o_spec = pl.BlockSpec((tm, n_pad), lambda i: (i, 0))

    compiler_params = pltpu.CompilerParams(
        dimension_semantics=("parallel",),   # shard batch tiles across v7x's 2 TCs
        vmem_limit_bytes=32 * 1024 * 1024,   # sized for v7x's 64 MiB physical VMEM
    )
    out_shape = jax.ShapeDtypeStruct((b_pad, n_pad), jnp.float32)

    use_dropout = training and p > 0.0
    if not use_dropout:
        out = pl.pallas_call(
            _classifier_eval_kernel,
            grid=grid,
            in_specs=[x_spec, w_spec, b_spec],
            out_specs=o_spec,
            out_shape=out_shape,
            compiler_params=compiler_params,
        )(x2, w, b2)
    else:
        if key is None:
            key = jax.random.PRNGKey(0)
        keep_prob = max(0.0, 1.0 - float(p))
        # TODO(synk): on real TPU the mask could be drawn in-kernel with
        # pltpu.prng_seed/prng_random_bits (per-block seeded) to avoid B*F bytes
        # of extra HBM traffic; generated host-side here so the kernel also
        # lowers cleanly under interpret mode (no CPU rule for prng_seed).
        keep = jax.random.bernoulli(key, keep_prob, (b_pad, F_))
        mask = keep.astype(jnp.bfloat16)                       # exact 0/1
        scale = (1.0 / keep_prob) if keep_prob > 0.0 else 0.0  # p>=1 -> all-dropped
        kernel = functools.partial(_classifier_train_kernel, scale=scale)
        out = pl.pallas_call(
            kernel,
            grid=grid,
            in_specs=[x_spec, m_spec, w_spec, b_spec],
            out_specs=o_spec,
            out_shape=out_shape,
            compiler_params=compiler_params,
        )(x2, mask, w, b2)

    return out[:B, :N]


if __name__ == "__main__":
    # Classifier sits on a 2048-dim pooled feature map (e.g. ResNet avgpool
    # output of shape (B, 2048, 1, 1)).
    batch = 2
    in_features = 2048
    num_class = 4

    key = jax.random.PRNGKey(0)
    kx, kw, kb, kd = jax.random.split(key, 4)

    x = jax.random.normal(kx, (batch, in_features, 1, 1), dtype=jnp.float32)

    # Deterministic nn.Linear-style init: U(-1/sqrt(F), 1/sqrt(F)).
    bound = 1.0 / (in_features ** 0.5)
    weight = jax.random.uniform(
        kw, (num_class, in_features), minval=-bound, maxval=bound, dtype=jnp.float32
    )
    bias = jax.random.uniform(
        kb, (num_class,), minval=-bound, maxval=bound, dtype=jnp.float32
    )

    # Eval-mode forward (dropout is identity), matching PyTorch .eval() semantics.
    out = jax.block_until_ready(classifier_forward(x, weight, bias, training=False))
    assert out.shape == (batch, num_class)

    # Reference at the same bf16 input precision the kernel feeds the MXU.
    x_bf = x.reshape(batch, -1).astype(jnp.bfloat16).astype(jnp.float32)
    w_bf = weight.astype(jnp.bfloat16).astype(jnp.float32)
    ref = x_bf @ w_bf.T + bias
    assert jnp.allclose(out, ref, atol=2e-2, rtol=2e-2)

    # Exercise the training (fused dropout) kernel path once.
    out_train = jax.block_until_ready(
        classifier_forward(x, weight, bias, key=kd, p=0.5, training=True)
    )
    assert out_train.shape == (batch, num_class)
    assert bool(jnp.all(jnp.isfinite(out_train)))

    print("KERNEL_OK")
</pallas_src>

<mosaic_0001>
module attributes {stable_mosaic.version = 11 : i64} {
  func.func @_classifier_eval_kernel(%arg0: i32, %arg1: memref<2x2048xbf16, #tpu.memory_space<vmem>>, %arg2: memref<128x2048xbf16, #tpu.memory_space<vmem>>, %arg3: memref<1x128xf32, #tpu.memory_space<vmem>>, %arg4: memref<2x128xf32, #tpu.memory_space<vmem>>) attributes {dimension_semantics = [#tpu.dimension_semantics<parallel>], iteration_bounds = array<i64: 1>, scalar_prefetch = 0 : i64, scratch_operands = 0 : i64, tpu.core_type = #tpu.core_type<tc>, window_params = [{transform_indices = @transform_0, window_bounds = array<i64: 2, 2048>}, {pipeline_mode = #tpu.pipeline_mode<synchronous>, transform_indices = @transform_1, window_bounds = array<i64: 128, 2048>}, {pipeline_mode = #tpu.pipeline_mode<synchronous>, transform_indices = @transform_2, window_bounds = array<i64: 1, 128>}, {transform_indices = @transform_3, window_bounds = array<i64: 2, 128>}]} {
    %c0 = arith.constant 0 : index
    %c0_0 = arith.constant 0 : index
    %0 = vector.load %arg1[%c0, %c0_0] : memref<2x2048xbf16, #tpu.memory_space<vmem>>, vector<2x2048xbf16>
    %c0_1 = arith.constant 0 : index
    %c0_2 = arith.constant 0 : index
    %1 = vector.load %arg2[%c0_1, %c0_2] : memref<128x2048xbf16, #tpu.memory_space<vmem>>, vector<128x2048xbf16>
    %cst = arith.constant dense<0.000000e+00> : vector<2x128xf32>
    %2 = tpu.matmul %0, %1, %cst {dimension_numbers = #tpu.dot_dimension_numbers<[1], [1], [0], [0], [0, 0, 1, 0], [], []>} : vector<2x2048xbf16>, vector<128x2048xbf16>, vector<2x128xf32> -> vector<2x128xf32>
    %c0_3 = arith.constant 0 : index
    %c0_4 = arith.constant 0 : index
    %3 = vector.load %arg3[%c0_3, %c0_4] : memref<1x128xf32, #tpu.memory_space<vmem>>, vector<1x128xf32>
    %4 = vector.broadcast %3 : vector<1x128xf32> to vector<2x128xf32>
    %5 = arith.addf %2, %4 : vector<2x128xf32>
    %c0_5 = arith.constant 0 : index
    %c0_6 = arith.constant 0 : index
    %6 = vector.load %arg4[%c0_5, %c0_6] : memref<2x128xf32, #tpu.memory_space<vmem>>, vector<2x128xf32>
    tpu.vector_store %arg4[%c0_5, %c0_6], %5 {strides = array<i32>} : memref<2x128xf32, #tpu.memory_space<vmem>>, vector<2x128xf32>,
    return
  }
  func.func @transform_0(%arg0: i32) -> (i32, i32) {
    %c0_i32 = arith.constant 0 : i32
    %c0_i32_0 = arith.constant 0 : i32
    return %arg0, %c0_i32 : i32, i32
  }
  func.func @transform_1(%arg0: i32) -> (i32, i32) {
    %c0_i32 = arith.constant 0 : i32
    %c0_i32_0 = arith.constant 0 : i32
    %c0_i32_1 = arith.constant 0 : i32
    return %c0_i32, %c0_i32_0 : i32, i32
  }
  func.func @transform_2(%arg0: i32) -> (i32, i32) {
    %c0_i32 = arith.constant 0 : i32
    %c0_i32_0 = arith.constant 0 : i32
    %c0_i32_1 = arith.constant 0 : i32
    return %c0_i32, %c0_i32_0 : i32, i32
  }
  func.func @transform_3(%arg0: i32) -> (i32, i32) {
    %c0_i32 = arith.constant 0 : i32
    %c0_i32_0 = arith.constant 0 : i32
    return %arg0, %c0_i32 : i32, i32
  }
}

</mosaic_0001>

<llo_original>
// kernel: tpu_custom_call.1
$region0: #{tpu_custom_call.1}
  #allocation0 [shape = 'u32[]', space=smem, size = 0x4, offset = 0x4, fixed_abs, tag = 'smem constant byte address 0x4 - core index']
  #allocation1 [shape = 'u32[72,128]{1,0:T(1,128)}', space=vmem, size = 0x9000, scoped, tag = 'internal scratch']
  %s0 = inlined_call_operand.hbm [shape: bf16[2,2048], index: 0, kind: input, shape index: {}]
  %s1 = inlined_call_operand.hbm [shape: bf16[128,2048], index: 1, kind: input, shape index: {}]
  %s2 = inlined_call_operand.vmem [shape: f32[1,128], index: 2, kind: input, shape index: {}]
  %s3 = inlined_call_operand.hbm [shape: f32[2,128], index: 3, kind: output, shape index: {}]
  %s4 = sld [smem:[#allocation0]]
  $region30: #{tpu_custom_call.1} parent=0
    _
  %s6 = ssub.s32 1, %s4
  %s7 = scalar_select 0, %s6, %s4
  $region1: #{tpu_custom_call.1} parent=0
    #allocation2 [shape = 'u8[8192]{0}', space=vmem, size = 0x2000, scoped, tag = 'input window, operand 0, single buffered']
    #allocation3 [shape = 's32[1]{0}', space=sflag, size = 0x4, scoped, tag = 'scoped memory for tpu_custom_call.1']
    #allocation4 [shape = 's32[1]{0}', space=sflag, size = 0x4, scoped, tag = 'scoped memory for tpu_custom_call.1']
    #allocation5 [shape = 'u8[524288]{0}', space=vmem, size = 0x80000, scoped, tag = 'input window, operand 1, single buffered']
    #allocation6 [shape = 's32[1]{0}', space=sflag, size = 0x4, scoped, tag = 'scoped memory for tpu_custom_call.1']
    #allocation7 [shape = 'u8[1024]{0}', space=vmem, size = 0x400, scoped, tag = 'output window, operand 0, single buffered']
    %8 = vsyncpa [#allocation3], 0
    %9 = vsyncpa [#allocation6], 0
    %10 = vsyncpa [#allocation4], 0
    // Predicated region
    $region2: #{tpu_custom_call.1} parent=1 // pred_check
      _
    $region3: #{tpu_custom_call.1} parent=1 // pred_check_branch
      %12 = sbr.rel (0) target = $region5
    $region4: #{tpu_custom_call.1} parent=1 // pred_region
      %14 = vsyncadd [#allocation3], 0
      %s16 = sshll.u32 %s0, 4
      %s17 = int_to_ptr.hbm [resolvable:$true] %s16
      %s18 = sshll.u32 [#allocation2], 4
      %s19 = int_to_ptr.vmem [resolvable:$true] %s18
      %21 = dma.hbm_to_vmem [thread:$0]  %s17, 256, %s19, [#allocation3]
    $region5: #{tpu_custom_call.1} parent=1 // pred_fallthru
      _
    // Predicated region
    $region6: #{tpu_custom_call.1} parent=1 // pred_check
      _
    $region7: #{tpu_custom_call.1} parent=1 // pred_check_branch
      %23 = sbr.rel (0) target = $region9
    $region8: #{tpu_custom_call.1} parent=1 // pred_region
      %25 = vsyncadd [#allocation6], 0
      %s26 = sshll.u32 %s1, 4
      %s27 = int_to_ptr.hbm [resolvable:$true] %s26
      %s28 = sshll.u32 [#allocation5], 4
      %s29 = int_to_ptr.vmem [resolvable:$true] %s28
      %34 = dma.hbm_to_vmem [thread:$0]  %s27, 16384, %s29, [#allocation6], 1024, 1024, 64
    $region9: #{tpu_custom_call.1} parent=1 // pred_fallthru
      _
    // Predicated region
    $region10: #{tpu_custom_call.1} parent=1 // pred_check
      _
    $region11: #{tpu_custom_call.1} parent=1 // pred_check_branch
      %36 = sbr.rel (0) target = $region13
    $region12: #{tpu_custom_call.1} parent=1 // pred_region
      _
    $region13: #{tpu_custom_call.1} parent=1 // pred_fallthru
      _
    // Predicated region
    $region14: #{tpu_custom_call.1} parent=1 // pred_check
      _
    $region15: #{tpu_custom_call.1} parent=1 // pred_check_branch
      %38 = sbr.rel (0) target = $region17
    $region16: #{tpu_custom_call.1} parent=1 // pred_region
      %40 = dma.done [#allocation3], 256
    $region17: #{tpu_custom_call.1} parent=1 // pred_fallthru
      _
    // Predicated region
    $region18: #{tpu_custom_call.1} parent=1 // pred_check
      _
    $region19: #{tpu_custom_call.1} parent=1 // pred_check_branch
      %42 = sbr.rel (0) target = $region21
    $region20: #{tpu_custom_call.1} parent=1 // pred_region
      %44 = dma.done [#allocation6], 16384
    $region21: #{tpu_custom_call.1} parent=1 // pred_fallthru
      _
    %v45 = vld [vmem:[#allocation2] sm:$0xff]
    %v46 = vld [vmem:[#allocation2 + $0x8] sm:$0xff]
    %v47 = vld [vmem:[#allocation5] sm:$0xff]
    %v48 = vld [vmem:[#allocation5 + $0x8] sm:$0xff]
    %v49 = vld [vmem:[#allocation5 + $0x10] sm:$0xff]
    %v50 = vld [vmem:[#allocation5 + $0x18] sm:$0xff]
    %v51 = vld [vmem:[#allocation5 + $0x20] sm:$0xff]
    %v52 = vld [vmem:[#allocation5 + $0x28] sm:$0xff]
    %v53 = vld [vmem:[#allocation5 + $0x30] sm:$0xff]
    %v54 = vld [vmem:[#allocation5 + $0x38] sm:$0xff]
    %v55 = vld [vmem:[#allocation5 + $0x40] sm:$0xff]
    %v56 = vld [vmem:[#allocation5 + $0x48] sm:$0xff]
    %v57 = vld [vmem:[#allocation5 + $0x50] sm:$0xff]
    %v58 = vld [vmem:[#allocation5 + $0x58] sm:$0xff]
    %v59 = vld [vmem:[#allocation5 + $0x60] sm:$0xff]
    %v60 = vld [vmem:[#allocation5 + $0x68] sm:$0xff]
    %v61 = vld [vmem:[#allocation5 + $0x70] sm:$0xff]
    %v62 = vld [vmem:[#allocation5 + $0x78] sm:$0xff]
    %v63 = vld [vmem:[#allocation5 + $0x80] sm:$0xff]
    %v64 = vld [vmem:[#allocation5 + $0x88] sm:$0xff]
    %v65 = vld [vmem:[#allocation5 + $0x90] sm:$0xff]
    %v66 = vld [vmem:[#allocation5 + $0x98] sm:$0xff]
    %v67 = vld [vmem:[#allocation5 + $0xa0] sm:$0xff]
    %v68 = vld [vmem:[#allocation5 + $0xa8] sm:$0xff]
    %v69 = vld [vmem:[#allocation5 + $0xb0] sm:$0xff]
    %v70 = vld [vmem:[#allocation5 + $0xb8] sm:$0xff]
    %v71 = vld [vmem:[#allocation5 + $0xc0] sm:$0xff]
    %v72 = vld [vmem:[#allocation5 + $0xc8] sm:$0xff]
    %v73 = vld [vmem:[#allocation5 + $0xd0] sm:$0xff]
    %v74 = vld [vmem:[#allocation5 + $0xd8] sm:$0xff]
    %v75 = vld [vmem:[#allocation5 + $0xe0] sm:$0xff]
    %v76 = vld [vmem:[#allocation5 + $0xe8] sm:$0xff]
    %v77 = vld [vmem:[#allocation5 + $0xf0] sm:$0xff]
    %v78 = vld [vmem:[#allocation5 + $0xf8] sm:$0xff]
    %v79 = vld [vmem:[#allocation5 + $0x100] sm:$0xff]
    %v80 = vld [vmem:[#allocation5 + $0x108] sm:$0xff]
    %v81 = vld [vmem:[#allocation5 + $0x110] sm:$0xff]
    %v82 = vld [vmem:[#allocation5 + $0x118] sm:$0xff]
    %v83 = vld [vmem:[#allocation5 + $0x120] sm:$0xff]
    %v84 = vld [vmem:[#allocation5 + $0x128] sm:$0xff]
    %v85 = vld [vmem:[#allocation5 + $0x130] sm:$0xff]
    %v86 = vld [vmem:[#allocation5 + $0x138] sm:$0xff]
    %v87 = vld [vmem:[#allocation5 + $0x140] sm:$0xff]
    %v88 = vld [vmem:[#allocation5 + $0x148] sm:$0xff]
    %v89 = vld [vmem:[#allocation5 + $0x150] sm:$0xff]
    %v90 = vld [vmem:[#allocation5 + $0x158] sm:$0xff]
    %v91 = vld [vmem:[#allocation5 + $0x160] sm:$0xff]
    %v92 = vld [vmem:[#allocation5 + $0x168] sm:$0xff]
    %v93 = vld [vmem:[#allocation5 + $0x170] sm:$0xff]
    %v94 = vld [vmem:[#allocation5 + $0x178] sm:$0xff]
    %v95 = vld [vmem:[#allocation5 + $0x180] sm:$0xff]
    %v96 = vld [vmem:[#allocation5 + $0x188] sm:$0xff]
    %v97 = vld [vmem:[#allocation5 + $0x190] sm:$0xff]
    %v98 = vld [vmem:[#allocation5 + $0x198] sm:$0xff]
    %v99 = vld [vmem:[#allocation5 + $0x1a0] sm:$0xff]
    %v100 = vld [vmem:[#allocation5 + $0x1a8] sm:$0xff]
    %v101 = vld [vmem:[#allocation5 + $0x1b0] sm:$0xff]
    %v102 = vld [vmem:[#allocation5 + $0x1b8] sm:$0xff]
    %v103 = vld [vmem:[#allocation5 + $0x1c0] sm:$0xff]
    %v104 = vld [vmem:[#allocation5 + $0x1c8] sm:$0xff]
    %v105 = vld [vmem:[#allocation5 + $0x1d0] sm:$0xff]
    %v106 = vld [vmem:[#allocation5 + $0x1d8] sm:$0xff]
    %v107 = vld [vmem:[#allocation5 + $0x1e0] sm:$0xff]
    %v108 = vld [vmem:[#allocation5 + $0x1e8] sm:$0xff]
    %v109 = vld [vmem:[#allocation5 + $0x1f0] sm:$0xff]
    %v110 = vld [vmem:[#allocation5 + $0x1f8] sm:$0xff]
    %v111 = vld [vmem:[#allocation5 + $0x200] sm:$0xff]
    %v112 = vld [vmem:[#allocation5 + $0x208] sm:$0xff]
    %v113 = vld [vmem:[#allocation5 + $0x210] sm:$0xff]
    %v114 = vld [vmem:[#allocation5 + $0x218] sm:$0xff]
    %v115 = vld [vmem:[#allocation5 + $0x220] sm:$0xff]
    %v116 = vld [vmem:[#allocation5 + $0x228] sm:$0xff]
    %v117 = vld [vmem:[#allocation5 + $0x230] sm:$0xff]
    %v118 = vld [vmem:[#allocation5 + $0x238] sm:$0xff]
    %v119 = vld [vmem:[#allocation5 + $0x240] sm:$0xff]
    %v120 = vld [vmem:[#allocation5 + $0x248] sm:$0xff]
    %v121 = vld [vmem:[#allocation5 + $0x250] sm:$0xff]
    %v122 = vld [vmem:[#allocation5 + $0x258] sm:$0xff]
    %v123 = vld [vmem:[#allocation5 + $0x260] sm:$0xff]
    %v124 = vld [vmem:[#allocation5 + $0x268] sm:$0xff]
    %v125 = vld [vmem:[#allocation5 + $0x270] sm:$0xff]
    %v126 = vld [vmem:[#allocation5 + $0x278] sm:$0xff]
    %v127 = vld [vmem:[#allocation5 + $0x280] sm:$0xff]
    %v128 = vld [vmem:[#allocation5 + $0x288] sm:$0xff]
    %v129 = vld [vmem:[#allocation5 + $0x290] sm:$0xff]
    %v130 = vld [vmem:[#allocation5 + $0x298] sm:$0xff]
    %v131 = vld [vmem:[#allocation5 + $0x2a0] sm:$0xff]
    %v132 = vld [vmem:[#allocation5 + $0x2a8] sm:$0xff]
    %v133 = vld [vmem:[#allocation5 + $0x2b0] sm:$0xff]
    %v134 = vld [vmem:[#allocation5 + $0x2b8] sm:$0xff]
    %v135 = vld [vmem:[#allocation5 + $0x2c0] sm:$0xff]
    %v136 = vld [vmem:[#allocation5 + $0x2c8] sm:$0xff]
    %v137 = vld [vmem:[#allocation5 + $0x2d0] sm:$0xff]
    %v138 = vld [vmem:[#allocation5 + $0x2d8] sm:$0xff]
    %v139 = vld [vmem:[#allocation5 + $0x2e0] sm:$0xff]
    %v140 = vld [vmem:[#allocation5 + $0x2e8] sm:$0xff]
    %v141 = vld [vmem:[#allocation5 + $0x2f0] sm:$0xff]
    %v142 = vld [vmem:[#allocation5 + $0x2f8] sm:$0xff]
    %v143 = vld [vmem:[#allocation5 + $0x300] sm:$0xff]
    %v144 = vld [vmem:[#allocation5 + $0x308] sm:$0xff]
    %v145 = vld [vmem:[#allocation5 + $0x310] sm:$0xff]
    %v146 = vld [vmem:[#allocation5 + $0x318] sm:$0xff]
    %v147 = vld [vmem:[#allocation5 + $0x320] sm:$0xff]
    %v148 = vld [vmem:[#allocation5 + $0x328] sm:$0xff]
    %v149 = vld [vmem:[#allocation5 + $0x330] sm:$0xff]
    %v150 = vld [vmem:[#allocation5 + $0x338] sm:$0xff]
    %v151 = vld [vmem:[#allocation5 + $0x340] sm:$0xff]
    %v152 = vld [vmem:[#allocation5 + $0x348] sm:$0xff]
    %v153 = vld [vmem:[#allocation5 + $0x350] sm:$0xff]
    %v154 = vld [vmem:[#allocation5 + $0x358] sm:$0xff]
    %v155 = vld [vmem:[#allocation5 + $0x360] sm:$0xff]
    %v156 = vld [vmem:[#allocation5 + $0x368] sm:$0xff]
    %v157 = vld [vmem:[#allocation5 + $0x370] sm:$0xff]
    %v158 = vld [vmem:[#allocation5 + $0x378] sm:$0xff]
    %v159 = vld [vmem:[#allocation5 + $0x380] sm:$0xff]
    %v160 = vld [vmem:[#allocation5 + $0x388] sm:$0xff]
    %v161 = vld [vmem:[#allocation5 + $0x390] sm:$0xff]
    %v162 = vld [vmem:[#allocation5 + $0x398] sm:$0xff]
    %v163 = vld [vmem:[#allocation5 + $0x3a0] sm:$0xff]
    %v164 = vld [vmem:[#allocation5 + $0x3a8] sm:$0xff]
    %v165 = vld [vmem:[#allocation5 + $0x3b0] sm:$0xff]
    %v166 = vld [vmem:[#allocation5 + $0x3b8] sm:$0xff]
    %v167 = vld [vmem:[#allocation5 + $0x3c0] sm:$0xff]
    %v168 = vld [vmem:[#allocation5 + $0x3c8] sm:$0xff]
    %v169 = vld [vmem:[#allocation5 + $0x3d0] sm:$0xff]
    %v170 = vld [vmem:[#allocation5 + $0x3d8] sm:$0xff]
    %v171 = vld [vmem:[#allocation5 + $0x3e0] sm:$0xff]
    %v172 = vld [vmem:[#allocation5 + $0x3e8] sm:$0xff]
    %v173 = vld [vmem:[#allocation5 + $0x3f0] sm:$0xff]
    %v174 = vld [vmem:[#allocation5 + $0x3f8] sm:$0xff]
    %v175 = vld [vmem:[%s2] sm:$0x1]
    %v177 = vperm.slane %v175, 0
    %180 = vst [vmem:[#allocation1] ss:$9 sm:$0xff] %v45
    %v181 = vld [vmem:[#allocation1] sm:$0xff]
    %v182 = vld [vmem:[#allocation1 + $0x9] sm:$0xff]
    %v183 = vld [vmem:[#allocation1 + $0x12] sm:$0xff]
    %v184 = vld [vmem:[#allocation1 + $0x1b] sm:$0xff]
    %v185 = vld [vmem:[#allocation1 + $0x24] sm:$0xff]
    %v186 = vld [vmem:[#allocation1 + $0x2d] sm:$0xff]
    %v187 = vld [vmem:[#allocation1 + $0x36] sm:$0xff]
    %v188 = vld [vmem:[#allocation1 + $0x3f] sm:$0xff]
    %190 = vst [vmem:[#allocation1] ss:$9 sm:$0xff] %v46
    %v191 = vld [vmem:[#allocation1] sm:$0xff]
    %v192 = vld [vmem:[#allocation1 + $0x9] sm:$0xff]
    %v193 = vld [vmem:[#allocation1 + $0x12] sm:$0xff]
    %v194 = vld [vmem:[#allocation1 + $0x1b] sm:$0xff]
    %v195 = vld [vmem:[#allocation1 + $0x24] sm:$0xff]
    %v196 = vld [vmem:[#allocation1 + $0x2d] sm:$0xff]
    %v197 = vld [vmem:[#allocation1 + $0x36] sm:$0xff]
    %v198 = vld [vmem:[#allocation1 + $0x3f] sm:$0xff]
    %v343 = vunpack.c.l.b16 %v47
    %v344 = vunpack.c.h.b16 %v47
    %v345 = vunpack.c.l.b16 %v48
    %v346 = vunpack.c.h.b16 %v48
    %v347 = vunpack.c.l.b16 %v49
    %v348 = vunpack.c.h.b16 %v49
    %v349 = vunpack.c.l.b16 %v50
    %v350 = vunpack.c.h.b16 %v50
    %v351 = vunpack.c.l.b16 %v51
    %v352 = vunpack.c.h.b16 %v51
    %v353 = vunpack.c.l.b16 %v52
    %v354 = vunpack.c.h.b16 %v52
    %v355 = vunpack.c.l.b16 %v53
    %v356 = vunpack.c.h.b16 %v53
    %v357 = vunpack.c.l.b16 %v54
    %v358 = vunpack.c.h.b16 %v54
    %v359 = vunpack.c.l.b16 %v55
    %v360 = vunpack.c.h.b16 %v55
    %v361 = vunpack.c.l.b16 %v56
    %v362 = vunpack.c.h.b16 %v56
    %v363 = vunpack.c.l.b16 %v57
    %v364 = vunpack.c.h.b16 %v57
    %v365 = vunpack.c.l.b16 %v58
    %v366 = vunpack.c.h.b16 %v58
    %v367 = vunpack.c.l.b16 %v59
    %v368 = vunpack.c.h.b16 %v59
    %v369 = vunpack.c.l.b16 %v60
    %v370 = vunpack.c.h.b16 %v60
    %v371 = vunpack.c.l.b16 %v61
    %v372 = vunpack.c.h.b16 %v61
    %v373 = vunpack.c.l.b16 %v62
    %v374 = vunpack.c.h.b16 %v62
    %v375 = vunpack.c.l.b16 %v63
    %v376 = vunpack.c.h.b16 %v63
    %v377 = vunpack.c.l.b16 %v64
    %v378 = vunpack.c.h.b16 %v64
    %v379 = vunpack.c.l.b16 %v65
    %v380 = vunpack.c.h.b16 %v65
    %v381 = vunpack.c.l.b16 %v66
    %v382 = vunpack.c.h.b16 %v66
    %v383 = vunpack.c.l.b16 %v67
    %v384 = vunpack.c.h.b16 %v67
    %v385 = vunpack.c.l.b16 %v68
    %v386 = vunpack.c.h.b16 %v68
    %v387 = vunpack.c.l.b16 %v69
    %v388 = vunpack.c.h.b16 %v69
    %v389 = vunpack.c.l.b16 %v70
    %v390 = vunpack.c.h.b16 %v70
    %v391 = vunpack.c.l.b16 %v71
    %v392 = vunpack.c.h.b16 %v71
    %v393 = vunpack.c.l.b16 %v72
    %v394 = vunpack.c.h.b16 %v72
    %v395 = vunpack.c.l.b16 %v73
    %v396 = vunpack.c.h.b16 %v73
    %v397 = vunpack.c.l.b16 %v74
    %v398 = vunpack.c.h.b16 %v74
    %v399 = vunpack.c.l.b16 %v75
    %v400 = vunpack.c.h.b16 %v75
    %v401 = vunpack.c.l.b16 %v76
    %v402 = vunpack.c.h.b16 %v76
    %v403 = vunpack.c.l.b16 %v77
    %v404 = vunpack.c.h.b16 %v77
    %v405 = vunpack.c.l.b16 %v78
    %v406 = vunpack.c.h.b16 %v78
    %v407 = vunpack.c.l.b16 %v79
    %v408 = vunpack.c.h.b16 %v79
    %v409 = vunpack.c.l.b16 %v80
    %v410 = vunpack.c.h.b16 %v80
    %v411 = vunpack.c.l.b16 %v81
    %v412 = vunpack.c.h.b16 %v81
    %v413 = vunpack.c.l.b16 %v82
    %v414 = vunpack.c.h.b16 %v82
    %v415 = vunpack.c.l.b16 %v83
    %v416 = vunpack.c.h.b16 %v83
    %v417 = vunpack.c.l.b16 %v84
    %v418 = vunpack.c.h.b16 %v84
    %v419 = vunpack.c.l.b16 %v85
    %v420 = vunpack.c.h.b16 %v85
    %v421 = vunpack.c.l.b16 %v86
    %v422 = vunpack.c.h.b16 %v86
    %v423 = vunpack.c.l.b16 %v87
    %v424 = vunpack.c.h.b16 %v87
    %v425 = vunpack.c.l.b16 %v88
    %v426 = vunpack.c.h.b16 %v88
    %v427 = vunpack.c.l.b16 %v89
    %v428 = vunpack.c.h.b16 %v89
    %v429 = vunpack.c.l.b16 %v90
    %v430 = vunpack.c.h.b16 %v90
    %v431 = vunpack.c.l.b16 %v91
    %v432 = vunpack.c.h.b16 %v91
    %v433 = vunpack.c.l.b16 %v92
    %v434 = vunpack.c.h.b16 %v92
    %v435 = vunpack.c.l.b16 %v93
    %v436 = vunpack.c.h.b16 %v93
    %v437 = vunpack.c.l.b16 %v94
    %v438 = vunpack.c.h.b16 %v94
    %v439 = vunpack.c.l.b16 %v95
    %v440 = vunpack.c.h.b16 %v95
    %v441 = vunpack.c.l.b16 %v96
    %v442 = vunpack.c.h.b16 %v96
    %v443 = vunpack.c.l.b16 %v97
    %v444 = vunpack.c.h.b16 %v97
    %v445 = vunpack.c.l.b16 %v98
    %v446 = vunpack.c.h.b16 %v98
    %v447 = vunpack.c.l.b16 %v99
    %v448 = vunpack.c.h.b16 %v99
    %v449 = vunpack.c.l.b16 %v100
    %v450 = vunpack.c.h.b16 %v100
    %v451 = vunpack.c.l.b16 %v101
    %v452 = vunpack.c.h.b16 %v101
    %v453 = vunpack.c.l.b16 %v102
    %v454 = vunpack.c.h.b16 %v102
    %v455 = vunpack.c.l.b16 %v103
    %v456 = vunpack.c.h.b16 %v103
    %v457 = vunpack.c.l.b16 %v104
    %v458 = vunpack.c.h.b16 %v104
    %v459 = vunpack.c.l.b16 %v105
    %v460 = vunpack.c.h.b16 %v105
    %v461 = vunpack.c.l.b16 %v106
    %v462 = vunpack.c.h.b16 %v106
    %v463 = vunpack.c.l.b16 %v107
    %v464 = vunpack.c.h.b16 %v107
    %v465 = vunpack.c.l.b16 %v108
    %v466 = vunpack.c.h.b16 %v108
    %v467 = vunpack.c.l.b16 %v109
    %v468 = vunpack.c.h.b16 %v109
    %v469 = vunpack.c.l.b16 %v110
    %v470 = vunpack.c.h.b16 %v110
    %v471 = vunpack.c.l.b16 %v111
    %v472 = vunpack.c.h.b16 %v111
    %v473 = vunpack.c.l.b16 %v112
    %v474 = vunpack.c.h.b16 %v112
    %v475 = vunpack.c.l.b16 %v113
    %v476 = vunpack.c.h.b16 %v113
    %v477 = vunpack.c.l.b16 %v114
    %v478 = vunpack.c.h.b16 %v114
    %v479 = vunpack.c.l.b16 %v115
    %v480 = vunpack.c.h.b16 %v115
    %v481 = vunpack.c.l.b16 %v116
    %v482 = vunpack.c.h.b16 %v116
    %v483 = vunpack.c.l.b16 %v117
    %v484 = vunpack.c.h.b16 %v117
    %v485 = vunpack.c.l.b16 %v118
    %v486 = vunpack.c.h.b16 %v118
    %v487 = vunpack.c.l.b16 %v119
    %v488 = vunpack.c.h.b16 %v119
    %v489 = vunpack.c.l.b16 %v120
    %v490 = vunpack.c.h.b16 %v120
    %v491 = vunpack.c.l.b16 %v121
    %v492 = vunpack.c.h.b16 %v121
    %v493 = vunpack.c.l.b16 %v122
    %v494 = vunpack.c.h.b16 %v122
    %v495 = vunpack.c.l.b16 %v123
    %v496 = vunpack.c.h.b16 %v123
    %v497 = vunpack.c.l.b16 %v124
    %v498 = vunpack.c.h.b16 %v124
    %v499 = vunpack.c.l.b16 %v125
    %v500 = vunpack.c.h.b16 %v125
    %v501 = vunpack.c.l.b16 %v126
    %v502 = vunpack.c.h.b16 %v126
    %v503 = vunpack.c.l.b16 %v127
    %v504 = vunpack.c.h.b16 %v127
    %v505 = vunpack.c.l.b16 %v128
    %v506 = vunpack.c.h.b16 %v128
    %v507 = vunpack.c.l.b16 %v129
    %v508 = vunpack.c.h.b16 %v129
    %v509 = vunpack.c.l.b16 %v130
    %v510 = vunpack.c.h.b16 %v130
    %v511 = vunpack.c.l.b16 %v131
    %v512 = vunpack.c.h.b16 %v131
    %v513 = vunpack.c.l.b16 %v132
    %v514 = vunpack.c.h.b16 %v132
    %v515 = vunpack.c.l.b16 %v133
    %v516 = vunpack.c.h.b16 %v133
    %v517 = vunpack.c.l.b16 %v134
    %v518 = vunpack.c.h.b16 %v134
    %v519 = vunpack.c.l.b16 %v135
    %v520 = vunpack.c.h.b16 %v135
    %v521 = vunpack.c.l.b16 %v136
    %v522 = vunpack.c.h.b16 %v136
    %v523 = vunpack.c.l.b16 %v137
    %v524 = vunpack.c.h.b16 %v137
    %v525 = vunpack.c.l.b16 %v138
    %v526 = vunpack.c.h.b16 %v138
    %v527 = vunpack.c.l.b16 %v139
    %v528 = vunpack.c.h.b16 %v139
    %v529 = vunpack.c.l.b16 %v140
    %v530 = vunpack.c.h.b16 %v140
    %v531 = vunpack.c.l.b16 %v141
    %v532 = vunpack.c.h.b16 %v141
    %v533 = vunpack.c.l.b16 %v142
    %v534 = vunpack.c.h.b16 %v142
    %v535 = vunpack.c.l.b16 %v143
    %v536 = vunpack.c.h.b16 %v143
    %v537 = vunpack.c.l.b16 %v144
    %v538 = vunpack.c.h.b16 %v144
    %v539 = vunpack.c.l.b16 %v145
    %v540 = vunpack.c.h.b16 %v145
    %v541 = vunpack.c.l.b16 %v146
    %v542 = vunpack.c.h.b16 %v146
    %v543 = vunpack.c.l.b16 %v147
    %v544 = vunpack.c.h.b16 %v147
    %v545 = vunpack.c.l.b16 %v148
    %v546 = vunpack.c.h.b16 %v148
    %v547 = vunpack.c.l.b16 %v149
    %v548 = vunpack.c.h.b16 %v149
    %v549 = vunpack.c.l.b16 %v150
    %v550 = vunpack.c.h.b16 %v150
    %v551 = vunpack.c.l.b16 %v151
    %v552 = vunpack.c.h.b16 %v151
    %v553 = vunpack.c.l.b16 %v152
    %v554 = vunpack.c.h.b16 %v152
    %v555 = vunpack.c.l.b16 %v153
    %v556 = vunpack.c.h.b16 %v153
    %v557 = vunpack.c.l.b16 %v154
    %v558 = vunpack.c.h.b16 %v154
    %v559 = vunpack.c.l.b16 %v155
    %v560 = vunpack.c.h.b16 %v155
    %v561 = vunpack.c.l.b16 %v156
    %v562 = vunpack.c.h.b16 %v156
    %v563 = vunpack.c.l.b16 %v157
    %v564 = vunpack.c.h.b16 %v157
    %v565 = vunpack.c.l.b16 %v158
    %v566 = vunpack.c.h.b16 %v158
    %v567 = vunpack.c.l.b16 %v159
    %v568 = vunpack.c.h.b16 %v159
    %v569 = vunpack.c.l.b16 %v160
    %v570 = vunpack.c.h.b16 %v160
    %v571 = vunpack.c.l.b16 %v161
    %v572 = vunpack.c.h.b16 %v161
    %v573 = vunpack.c.l.b16 %v162
    %v574 = vunpack.c.h.b16 %v162
    %v575 = vunpack.c.l.b16 %v163
    %v576 = vunpack.c.h.b16 %v163
    %v577 = vunpack.c.l.b16 %v164
    %v578 = vunpack.c.h.b16 %v164
    %v579 = vunpack.c.l.b16 %v165
    %v580 = vunpack.c.h.b16 %v165
    %v581 = vunpack.c.l.b16 %v166
    %v582 = vunpack.c.h.b16 %v166
    %v583 = vunpack.c.l.b16 %v167
    %v584 = vunpack.c.h.b16 %v167
    %v585 = vunpack.c.l.b16 %v168
    %v586 = vunpack.c.h.b16 %v168
    %v587 = vunpack.c.l.b16 %v169
    %v588 = vunpack.c.h.b16 %v169
    %v589 = vunpack.c.l.b16 %v170
    %v590 = vunpack.c.h.b16 %v170
    %v591 = vunpack.c.l.b16 %v171
    %v592 = vunpack.c.h.b16 %v171
    %v593 = vunpack.c.l.b16 %v172
    %v594 = vunpack.c.h.b16 %v172
    %v595 = vunpack.c.l.b16 %v173
    %v596 = vunpack.c.h.b16 %v173
    %v597 = vunpack.c.l.b16 %v174
    %v598 = vunpack.c.h.b16 %v174
    %v599 = vpack.c.b16 %v359, %v343
    %v600 = vpack.c.b16 %v360, %v344
    %v601 = vpack.c.b16 %v361, %v345
    %v602 = vpack.c.b16 %v362, %v346
    %v603 = vpack.c.b16 %v363, %v347
    %v604 = vpack.c.b16 %v364, %v348
    %v605 = vpack.c.b16 %v365, %v349
    %v606 = vpack.c.b16 %v366, %v350
    %v607 = vpack.c.b16 %v367, %v351
    %v608 = vpack.c.b16 %v368, %v352
    %v609 = vpack.c.b16 %v369, %v353
    %v610 = vpack.c.b16 %v370, %v354
    %v611 = vpack.c.b16 %v371, %v355
    %v612 = vpack.c.b16 %v372, %v356
    %v613 = vpack.c.b16 %v373, %v357
    %v614 = vpack.c.b16 %v374, %v358
    %v615 = vpack.c.b16 %v391, %v375
    %v616 = vpack.c.b16 %v392, %v376
    %v617 = vpack.c.b16 %v393, %v377
    %v618 = vpack.c.b16 %v394, %v378
    %v619 = vpack.c.b16 %v395, %v379
    %v620 = vpack.c.b16 %v396, %v380
    %v621 = vpack.c.b16 %v397, %v381
    %v622 = vpack.c.b16 %v398, %v382
    %v623 = vpack.c.b16 %v399, %v383
    %v624 = vpack.c.b16 %v400, %v384
    %v625 = vpack.c.b16 %v401, %v385
    %v626 = vpack.c.b16 %v402, %v386
    %v627 = vpack.c.b16 %v403, %v387
    %v628 = vpack.c.b16 %v404, %v388
    %v629 = vpack.c.b16 %v405, %v389
    %v630 = vpack.c.b16 %v406, %v390
    %v631 = vpack.c.b16 %v423, %v407
    %v632 = vpack.c.b16 %v424, %v408
    %v633 = vpack.c.b16 %v425, %v409
    %v634 = vpack.c.b16 %v426, %v410
    %v635 = vpack.c.b16 %v427, %v411
    %v636 = vpack.c.b16 %v428, %v412
    %v637 = vpack.c.b16 %v429, %v413
    %v638 = vpack.c.b16 %v430, %v414
    %v639 = vpack.c.b16 %v431, %v415
    %v640 = vpack.c.b16 %v432, %v416
    %v641 = vpack.c.b16 %v433, %v417
    %v642 = vpack.c.b16 %v434, %v418
    %v643 = vpack.c.b16 %v435, %v419
    %v644 = vpack.c.b16 %v436, %v420
    %v645 = vpack.c.b16 %v437, %v421
    %v646 = vpack.c.b16 %v438, %v422
    %v647 = vpack.c.b16 %v455, %v439
    %v648 = vpack.c.b16 %v456, %v440
    %v649 = vpack.c.b16 %v457, %v441
    %v650 = vpack.c.b16 %v458, %v442
    %v651 = vpack.c.b16 %v459, %v443
    %v652 = vpack.c.b16 %v460, %v444
    %v653 = vpack.c.b16 %v461, %v445
    %v654 = vpack.c.b16 %v462, %v446
    %v655 = vpack.c.b16 %v463, %v447
    %v656 = vpack.c.b16 %v464, %v448
    %v657 = vpack.c.b16 %v465, %v449
    %v658 = vpack.c.b16 %v466, %v450
    %v659 = vpack.c.b16 %v467, %v451
    %v660 = vpack.c.b16 %v468, %v452
    %v661 = vpack.c.b16 %v469, %v453
    %v662 = vpack.c.b16 %v470, %v454
    %v663 = vpack.c.b16 %v487, %v471
    %v664 = vpack.c.b16 %v488, %v472
    %v665 = vpack.c.b16 %v489, %v473
    %v666 = vpack.c.b16 %v490, %v474
    %v667 = vpack.c.b16 %v491, %v475
    %v668 = vpack.c.b16 %v492, %v476
    %v669 = vpack.c.b16 %v493, %v477
    %v670 = vpack.c.b16 %v494, %v478
    %v671 = vpack.c.b16 %v495, %v479
    %v672 = vpack.c.b16 %v496, %v480
    %v673 = vpack.c.b16 %v497, %v481
    %v674 = vpack.c.b16 %v498, %v482
    %v675 = vpack.c.b16 %v499, %v483
    %v676 = vpack.c.b16 %v500, %v484
    %v677 = vpack.c.b16 %v501, %v485
    %v678 = vpack.c.b16 %v502, %v486
    %v679 = vpack.c.b16 %v519, %v503
    %v680 = vpack.c.b16 %v520, %v504
    %v681 = vpack.c.b16 %v521, %v505
    %v682 = vpack.c.b16 %v522, %v506
    %v683 = vpack.c.b16 %v523, %v507
    %v684 = vpack.c.b16 %v524, %v508
    %v685 = vpack.c.b16 %v525, %v509
    %v686 = vpack.c.b16 %v526, %v510
    %v687 = vpack.c.b16 %v527, %v511
    %v688 = vpack.c.b16 %v528, %v512
    %v689 = vpack.c.b16 %v529, %v513
    %v690 = vpack.c.b16 %v530, %v514
    %v691 = vpack.c.b16 %v531, %v515
    %v692 = vpack.c.b16 %v532, %v516
    %v693 = vpack.c.b16 %v533, %v517
    %v694 = vpack.c.b16 %v534, %v518
    %v695 = vpack.c.b16 %v551, %v535
    %v696 = vpack.c.b16 %v552, %v536
    %v697 = vpack.c.b16 %v553, %v537
    %v698 = vpack.c.b16 %v554, %v538
    %v699 = vpack.c.b16 %v555, %v539
    %v700 = vpack.c.b16 %v556, %v540
    %v701 = vpack.c.b16 %v557, %v541
    %v702 = vpack.c.b16 %v558, %v542
    %v703 = vpack.c.b16 %v559, %v543
    %v704 = vpack.c.b16 %v560, %v544
    %v705 = vpack.c.b16 %v561, %v545
    %v706 = vpack.c.b16 %v562, %v546
    %v707 = vpack.c.b16 %v563, %v547
    %v708 = vpack.c.b16 %v564, %v548
    %v709 = vpack.c.b16 %v565, %v549
    %v710 = vpack.c.b16 %v566, %v550
    %v711 = vpack.c.b16 %v583, %v567
    %v712 = vpack.c.b16 %v584, %v568
    %v713 = vpack.c.b16 %v585, %v569
    %v714 = vpack.c.b16 %v586, %v570
    %v715 = vpack.c.b16 %v587, %v571
    %v716 = vpack.c.b16 %v588, %v572
    %v717 = vpack.c.b16 %v589, %v573
    %v718 = vpack.c.b16 %v590, %v574
    %v719 = vpack.c.b16 %v591, %v575
    %v720 = vpack.c.b16 %v592, %v576
    %v721 = vpack.c.b16 %v593, %v577
    %v722 = vpack.c.b16 %v594, %v578
    %v723 = vpack.c.b16 %v595, %v579
    %v724 = vpack.c.b16 %v596, %v580
    %v725 = vpack.c.b16 %v597, %v581
    %v726 = vpack.c.b16 %v598, %v582
    %855 = vmatpush.bf16.xpose.msra.mxu0 %v711
    %856 = vmatpush.bf16.xpose.msra.mxu0 %v695
    %857 = vmatpush.bf16.xpose.msra.mxu0 %v679
    %858 = vmatpush.bf16.xpose.msra.mxu0 %v663
    %859 = vmatpush.bf16.xpose.msra.mxu0 %v647
    %860 = vmatpush.bf16.xpose.msra.mxu0 %v631
    %861 = vmatpush.bf16.xpose.msra.mxu0 %v615
    %862 = vmatpush.bf16.xpose.msra.mxu0 %v599
    %863 = vmatmul.bf16.gmra.mxu0 %v181
    %v864 = vpop.f32.mrf.mxu0
    %v865 = vadd.f32 %v177, %v864
    %v866 = vpop.f32.mrf.mxu0
    %867 = vdwg.mxu0
    %868 = vmatpush.bf16.xpose.msra.mxu0 %v712
    %869 = vmatpush.bf16.xpose.msra.mxu0 %v696
    %870 = vmatpush.bf16.xpose.msra.mxu0 %v680
    %871 = vmatpush.bf16.xpose.msra.mxu0 %v664
    %872 = vmatpush.bf16.xpose.msra.mxu0 %v648
    %873 = vmatpush.bf16.xpose.msra.mxu0 %v632
    %874 = vmatpush.bf16.xpose.msra.mxu0 %v616
    %875 = vmatpush.bf16.xpose.msra.mxu0 %v600
    %876 = vmatmul.bf16.gmra.mxu0 %v182
    %v877 = vpop.f32.mrf.mxu0
    %v878 = vadd.f32 %v865, %v877
    %v879 = vpop.f32.mrf.mxu0
    %880 = vdwg.mxu0
    %881 = vmatpush.bf16.xpose.msra.mxu0 %v713
    %882 = vmatpush.bf16.xpose.msra.mxu0 %v697
    %883 = vmatpush.bf16.xpose.msra.mxu0 %v681
    %884 = vmatpush.bf16.xpose.msra.mxu0 %v665
    %885 = vmatpush.bf16.xpose.msra.mxu0 %v649
    %886 = vmatpush.bf16.xpose.msra.mxu0 %v633
    %887 = vmatpush.bf16.xpose.msra.mxu0 %v617
    %888 = vmatpush.bf16.xpose.msra.mxu0 %v601
    %889 = vmatmul.bf16.gmra.mxu0 %v183
    %v890 = vpop.f32.mrf.mxu0
    %v891 = vadd.f32 %v878, %v890
    %v892 = vpop.f32.mrf.mxu0
    %893 = vdwg.mxu0
    %894 = vmatpush.bf16.xpose.msra.mxu0 %v714
    %895 = vmatpush.bf16.xpose.msra.mxu0 %v698
    %896 = vmatpush.bf16.xpose.msra.mxu0 %v682
    %897 = vmatpush.bf16.xpose.msra.mxu0 %v666
    %898 = vmatpush.bf16.xpose.msra.mxu0 %v650
    %899 = vmatpush.bf16.xpose.msra.mxu0 %v634
    %900 = vmatpush.bf16.xpose.msra.mxu0 %v618
    %901 = vmatpush.bf16.xpose.msra.mxu0 %v602
    %902 = vmatmul.bf16.gmra.mxu0 %v184
    %v903 = vpop.f32.mrf.mxu0
    %v904 = vadd.f32 %v891, %v903
    %v905 = vpop.f32.mrf.mxu0
    %906 = vdwg.mxu0
    %907 = vmatpush.bf16.xpose.msra.mxu0 %v715
    %908 = vmatpush.bf16.xpose.msra.mxu0 %v699
    %909 = vmatpush.bf16.xpose.msra.mxu0 %v683
    %910 = vmatpush.bf16.xpose.msra.mxu0 %v667
    %911 = vmatpush.bf16.xpose.msra.mxu0 %v651
    %912 = vmatpush.bf16.xpose.msra.mxu0 %v635
    %913 = vmatpush.bf16.xpose.msra.mxu0 %v619
    %914 = vmatpush.bf16.xpose.msra.mxu0 %v603
    %915 = vmatmul.bf16.gmra.mxu0 %v185
    %v916 = vpop.f32.mrf.mxu0
    %v917 = vadd.f32 %v904, %v916
    %v918 = vpop.f32.mrf.mxu0
    %919 = vdwg.mxu0
    %920 = vmatpush.bf16.xpose.msra.mxu0 %v716
    %921 = vmatpush.bf16.xpose.msra.mxu0 %v700
    %922 = vmatpush.bf16.xpose.msra.mxu0 %v684
    %923 = vmatpush.bf16.xpose.msra.mxu0 %v668
    %924 = vmatpush.bf16.xpose.msra.mxu0 %v652
    %925 = vmatpush.bf16.xpose.msra.mxu0 %v636
    %926 = vmatpush.bf16.xpose.msra.mxu0 %v620
    %927 = vmatpush.bf16.xpose.msra.mxu0 %v604
    %928 = vmatmul.bf16.gmra.mxu0 %v186
    %v929 = vpop.f32.mrf.mxu0
    %v930 = vadd.f32 %v917, %v929
    %v931 = vpop.f32.mrf.mxu0
    %932 = vdwg.mxu0
    %933 = vmatpush.bf16.xpose.msra.mxu0 %v717
    %934 = vmatpush.bf16.xpose.msra.mxu0 %v701
    %935 = vmatpush.bf16.xpose.msra.mxu0 %v685
    %936 = vmatpush.bf16.xpose.msra.mxu0 %v669
    %937 = vmatpush.bf16.xpose.msra.mxu0 %v653
    %938 = vmatpush.bf16.xpose.msra.mxu0 %v637
    %939 = vmatpush.bf16.xpose.msra.mxu0 %v621
    %940 = vmatpush.bf16.xpose.msra.mxu0 %v605
    %941 = vmatmul.bf16.gmra.mxu0 %v187
    %v942 = vpop.f32.mrf.mxu0
    %v943 = vadd.f32 %v930, %v942
    %v944 = vpop.f32.mrf.mxu0
    %945 = vdwg.mxu0
    %946 = vmatpush.bf16.xpose.msra.mxu0 %v718
    %947 = vmatpush.bf16.xpose.msra.mxu0 %v702
    %948 = vmatpush.bf16.xpose.msra.mxu0 %v686
    %949 = vmatpush.bf16.xpose.msra.mxu0 %v670
    %950 = vmatpush.bf16.xpose.msra.mxu0 %v654
    %951 = vmatpush.bf16.xpose.msra.mxu0 %v638
    %952 = vmatpush.bf16.xpose.msra.mxu0 %v622
    %953 = vmatpush.bf16.xpose.msra.mxu0 %v606
    %954 = vmatmul.bf16.gmra.mxu0 %v188
    %v955 = vpop.f32.mrf.mxu0
    %v956 = vadd.f32 %v943, %v955
    %v957 = vpop.f32.mrf.mxu0
    %958 = vdwg.mxu0
    %959 = vmatpush.bf16.xpose.msra.mxu0 %v719
    %960 = vmatpush.bf16.xpose.msra.mxu0 %v703
    %961 = vmatpush.bf16.xpose.msra.mxu0 %v687
    %962 = vmatpush.bf16.xpose.msra.mxu0 %v671
    %963 = vmatpush.bf16.xpose.msra.mxu0 %v655
    %964 = vmatpush.bf16.xpose.msra.mxu0 %v639
    %965 = vmatpush.bf16.xpose.msra.mxu0 %v623
    %966 = vmatpush.bf16.xpose.msra.mxu0 %v607
    %967 = vmatmul.bf16.gmra.mxu0 %v191
    %v968 = vpop.f32.mrf.mxu0
    %v969 = vadd.f32 %v956, %v968
    %v970 = vpop.f32.mrf.mxu0
    %971 = vdwg.mxu0
    %972 = vmatpush.bf16.xpose.msra.mxu0 %v720
    %973 = vmatpush.bf16.xpose.msra.mxu0 %v704
    %974 = vmatpush.bf16.xpose.msra.mxu0 %v688
    %975 = vmatpush.bf16.xpose.msra.mxu0 %v672
    %976 = vmatpush.bf16.xpose.msra.mxu0 %v656
    %977 = vmatpush.bf16.xpose.msra.mxu0 %v640
    %978 = vmatpush.bf16.xpose.msra.mxu0 %v624
    %979 = vmatpush.bf16.xpose.msra.mxu0 %v608
    %980 = vmatmul.bf16.gmra.mxu0 %v192
    %v981 = vpop.f32.mrf.mxu0
    %v982 = vadd.f32 %v969, %v981
    %v983 = vpop.f32.mrf.mxu0
    %984 = vdwg.mxu0
    %985 = vmatpush.bf16.xpose.msra.mxu0 %v721
    %986 = vmatpush.bf16.xpose.msra.mxu0 %v705
    %987 = vmatpush.bf16.xpose.msra.mxu0 %v689
    %988 = vmatpush.bf16.xpose.msra.mxu0 %v673
    %989 = vmatpush.bf16.xpose.msra.mxu0 %v657
    %990 = vmatpush.bf16.xpose.msra.mxu0 %v641
    %991 = vmatpush.bf16.xpose.msra.mxu0 %v625
    %992 = vmatpush.bf16.xpose.msra.mxu0 %v609
    %993 = vmatmul.bf16.gmra.mxu0 %v193
    %v994 = vpop.f32.mrf.mxu0
    %v995 = vadd.f32 %v982, %v994
    %v996 = vpop.f32.mrf.mxu0
    %997 = vdwg.mxu0
    %998 = vmatpush.bf16.xpose.msra.mxu0 %v722
    %999 = vmatpush.bf16.xpose.msra.mxu0 %v706
    %1000 = vmatpush.bf16.xpose.msra.mxu0 %v690
    %1001 = vmatpush.bf16.xpose.msra.mxu0 %v674
    %1002 = vmatpush.bf16.xpose.msra.mxu0 %v658
    %1003 = vmatpush.bf16.xpose.msra.mxu0 %v642
    %1004 = vmatpush.bf16.xpose.msra.mxu0 %v626
    %1005 = vmatpush.bf16.xpose.msra.mxu0 %v610
    %1006 = vmatmul.bf16.gmra.mxu0 %v194
    %v1007 = vpop.f32.mrf.mxu0
    %v1008 = vadd.f32 %v995, %v1007
    %v1009 = vpop.f32.mrf.mxu0
    %1010 = vdwg.mxu0
    %1011 = vmatpush.bf16.xpose.msra.mxu0 %v723
    %1012 = vmatpush.bf16.xpose.msra.mxu0 %v707
    %1013 = vmatpush.bf16.xpose.msra.mxu0 %v691
    %1014 = vmatpush.bf16.xpose.msra.mxu0 %v675
    %1015 = vmatpush.bf16.xpose.msra.mxu0 %v659
    %1016 = vmatpush.bf16.xpose.msra.mxu0 %v643
    %1017 = vmatpush.bf16.xpose.msra.mxu0 %v627
    %1018 = vmatpush.bf16.xpose.msra.mxu0 %v611
    %1019 = vmatmul.bf16.gmra.mxu0 %v195
    %v1020 = vpop.f32.mrf.mxu0
    %v1021 = vadd.f32 %v1008, %v1020
    %v1022 = vpop.f32.mrf.mxu0
    %1023 = vdwg.mxu0
    %1024 = vmatpush.bf16.xpose.msra.mxu0 %v724
    %1025 = vmatpush.bf16.xpose.msra.mxu0 %v708
    %1026 = vmatpush.bf16.xpose.msra.mxu0 %v692
    %1027 = vmatpush.bf16.xpose.msra.mxu0 %v676
    %1028 = vmatpush.bf16.xpose.msra.mxu0 %v660
    %1029 = vmatpush.bf16.xpose.msra.mxu0 %v644
    %1030 = vmatpush.bf16.xpose.msra.mxu0 %v628
    %1031 = vmatpush.bf16.xpose.msra.mxu0 %v612
    %1032 = vmatmul.bf16.gmra.mxu0 %v196
    %v1033 = vpop.f32.mrf.mxu0
    %v1034 = vadd.f32 %v1021, %v1033
    %v1035 = vpop.f32.mrf.mxu0
    %1036 = vdwg.mxu0
    %1037 = vmatpush.bf16.xpose.msra.mxu0 %v725
    %1038 = vmatpush.bf16.xpose.msra.mxu0 %v709
    %1039 = vmatpush.bf16.xpose.msra.mxu0 %v693
    %1040 = vmatpush.bf16.xpose.msra.mxu0 %v677
    %1041 = vmatpush.bf16.xpose.msra.mxu0 %v661
    %1042 = vmatpush.bf16.xpose.msra.mxu0 %v645
    %1043 = vmatpush.bf16.xpose.msra.mxu0 %v629
    %1044 = vmatpush.bf16.xpose.msra.mxu0 %v613
    %1045 = vmatmul.bf16.gmra.mxu0 %v197
    %v1046 = vpop.f32.mrf.mxu0
    %v1047 = vadd.f32 %v1034, %v1046
    %v1048 = vpop.f32.mrf.mxu0
    %1049 = vdwg.mxu0
    %1050 = vmatpush.bf16.xpose.msra.mxu0 %v726
    %1051 = vmatpush.bf16.xpose.msra.mxu0 %v710
    %1052 = vmatpush.bf16.xpose.msra.mxu0 %v694
    %1053 = vmatpush.bf16.xpose.msra.mxu0 %v678
    %1054 = vmatpush.bf16.xpose.msra.mxu0 %v662
    %1055 = vmatpush.bf16.xpose.msra.mxu0 %v646
    %1056 = vmatpush.bf16.xpose.msra.mxu0 %v630
    %1057 = vmatpush.bf16.xpose.msra.mxu0 %v614
    %1058 = vmatmul.bf16.gmra.mxu0 %v198
    %v1059 = vpop.f32.mrf.mxu0
    %v1060 = vadd.f32 %v1047, %v1059
    %v1061 = vpop.f32.mrf.mxu0
    %1062 = vdwg.mxu0
    %1063 = vst [vmem:[#allocation7] sm:$0x3] %v1060
    // Predicated region
    $region22: #{tpu_custom_call.1} parent=1 // pred_check
      _
    $region23: #{tpu_custom_call.1} parent=1 // pred_check_branch
      %1065 = sbr.rel (0) target = $region25
    $region24: #{tpu_custom_call.1} parent=1 // pred_region
      %1067 = vsyncadd [#allocation4], 0
      %s1069 = sshll.u32 [#allocation7], 4
      %s1070 = int_to_ptr.vmem [resolvable:$true] %s1069
      %s1071 = sshll.u32 %s3, 4
      %s1072 = int_to_ptr.hbm [resolvable:$true] %s1071
      %1074 = dma.vmem_to_hbm [thread:$0]  %s1070, 32, %s1072, [#allocation4]
    $region25: #{tpu_custom_call.1} parent=1 // pred_fallthru
      _
    // Predicated region
    $region26: #{tpu_custom_call.1} parent=1 // pred_check
      _
    $region27: #{tpu_custom_call.1} parent=1 // pred_check_branch
      %1076 = sbr.rel (0) target = $region29
    $region28: #{tpu_custom_call.1} parent=1 // pred_region
      %1078 = dma.done [#allocation4], 32
    $region29: #{tpu_custom_call.1} parent=1 // pred_fallthru
      _
    %1079 = vsyncpa [#allocation3], 1
    %1080 = vsyncpa [#allocation6], 1
    %1081 = vsyncpa [#allocation4], 1

</llo_original>
